<compile_context>
chip_gen: v7x
topology: tpu7x:2x2x1
jax: 0.10.0
libtpu: 0.0.40
codegen_flags: <defaults>
</compile_context>

<pallas_src>
import math
import functools

import jax
import jax.numpy as jnp
from jax import lax
from jax.experimental import pallas as pl
from jax.experimental.pallas import tpu as pltpu


def _isz(dt):
    return jnp.dtype(dt).itemsize


# ---------------------------------------------------------------------------
# Linear (projection) kernels: tiled matmul, bf16 MXU operands, f32 accumulator
# ---------------------------------------------------------------------------
def _linear_kernel(x_ref, w_ref, o_ref, acc_ref):
    @pl.when(pl.program_id(2) == 0)
    def _():
        acc_ref[...] = jnp.zeros_like(acc_ref)

    # Cast the activation tile to the weight dtype *inside* the kernel
    # (weights are stored pre-cast to bf16; no wrapper-side HBM round trip).
    acc_ref[...] += jnp.dot(x_ref[...].astype(w_ref.dtype), w_ref[...],
                            preferred_element_type=jnp.float32)

    @pl.when(pl.program_id(2) == pl.num_programs(2) - 1)
    def _():
        o_ref[...] = acc_ref[...].astype(o_ref.dtype)


def _linear_bias_kernel(x_ref, w_ref, b_ref, o_ref, acc_ref):
    @pl.when(pl.program_id(2) == 0)
    def _():
        acc_ref[...] = jnp.zeros_like(acc_ref)

    acc_ref[...] += jnp.dot(x_ref[...].astype(w_ref.dtype), w_ref[...],
                            preferred_element_type=jnp.float32)

    @pl.when(pl.program_id(2) == pl.num_programs(2) - 1)
    def _():
        o_ref[...] = (acc_ref[...] + b_ref[...]).astype(o_ref.dtype)


def _pick_tile(size, prefs):
    """Return (tile, padded_size).

    Prefers the largest tile in `prefs` that divides `size`.  Small/awkward
    dims use a full-extent block (always legal).  Large non-divisible dims are
    padded up to a multiple of the smallest preferred tile; the wrapper adds
    zero padding and slices the output back (zero K-padding contributes 0).
    """
    for p in prefs:
        if size % p == 0:
            return p, size
    if size <= prefs[0]:
        return size, size
    base = prefs[-1]
    padded = ((size + base - 1) // base) * base
    return base, padded


def pallas_linear(x, w, b=None, *, out_dtype=None):
    """y = x @ w (+ b).  x: (M, K), w: (K, OUT), b: (OUT,) or None."""
    M, K = x.shape
    Kw, OUT = w.shape
    assert K == Kw
    if out_dtype is None:
        out_dtype = x.dtype

    tm, Mp = _pick_tile(M, (256, 128))
    tk, Kp = _pick_tile(K, (1024, 512, 256, 128))
    tn, Np = _pick_tile(OUT, (512, 256, 128))

    if (Mp, Kp) != (M, K):
        x = jnp.pad(x, ((0, Mp - M), (0, Kp - K)))
    if (Kp, Np) != (K, OUT):
        w = jnp.pad(w, ((0, Kp - K), (0, Np - OUT)))
    bias = None
    if b is not None:
        bias = b.astype(jnp.float32).reshape(1, OUT)   # bias stays f32 (added to f32 acc)
        if Np != OUT:
            bias = jnp.pad(bias, ((0, 0), (0, Np - OUT)))

    grid = (Mp // tm, Np // tn, Kp // tk)

    in_specs = [
        pl.BlockSpec((tm, tk), lambda i, j, k: (i, k)),
        pl.BlockSpec((tk, tn), lambda i, j, k: (k, j)),
    ]
    args = [x, w]
    kernel = _linear_kernel
    if bias is not None:
        in_specs.append(pl.BlockSpec((1, tn), lambda i, j, k: (0, j)))
        args.append(bias)
        kernel = _linear_bias_kernel

    # VMEM budget from tile sizes (double-buffered inputs + f32 acc + output),
    # clamped to 64 MiB so it never exceeds v7x's 64 MiB physical VMEM.
    need = (2 * (tm * tk * _isz(x.dtype) + tk * tn * _isz(w.dtype))
            + tm * tn * 4 + 2 * tm * tn * _isz(out_dtype))
    if bias is not None:
        need += 2 * tn * 4
    vmem_limit = int(min(64 * 2**20, max(32 * 2**20, 2 * need)))

    out = pl.pallas_call(
        kernel,
        out_shape=jax.ShapeDtypeStruct((Mp, Np), out_dtype),
        grid_spec=pltpu.PrefetchScalarGridSpec(
            num_scalar_prefetch=0,
            grid=grid,
            in_specs=in_specs,
            out_specs=pl.BlockSpec((tm, tn), lambda i, j, k: (i, j)),
            scratch_shapes=[pltpu.VMEM((tm, tn), jnp.float32)],
        ),
        compiler_params=pltpu.CompilerParams(
            dimension_semantics=("parallel", "parallel", "arbitrary"),
            vmem_limit_bytes=vmem_limit,
        ),
    )(*args)

    if (Mp, Np) != (M, OUT):
        out = out[:M, :OUT]
    return out


# ---------------------------------------------------------------------------
# Attention core
# ---------------------------------------------------------------------------
def _heads_per_block(num_heads, head_dim):
    """heads_per_block s.t. heads_per_block*head_dim is a multiple of 128 and
    it divides num_heads; None -> use the small-dim fallback kernel."""
    if head_dim % 128 == 0:
        return 1
    if 128 % head_dim != 0:
        return None
    hpb = 128 // head_dim
    return hpb if num_heads % hpb == 0 else None


def _pick_q_tile(n):
    for t in (256, 128):
        if n % t == 0:
            return t
    return n


def _attn_heads_kernel(q_ref, k_ref, v_ref, o_ref, *,
                       heads_per_block, head_dim, scale, mxu_dtype):
    """One (batch, 128-lane head block, q tile) grid step.

    q_ref: (tq, hpb*Dh)   k_ref/v_ref: (n, hpb*Dh)   o_ref: (tq, hpb*Dh)
    """
    f32 = jnp.float32
    for j in range(heads_per_block):            # tiny static unroll (<= 128 // Dh)
        sl = slice(j * head_dim, (j + 1) * head_dim)
        # Ref slices (views), scale folded into q (tq*Dh mults, not tq*n).
        q = (q_ref[:, sl].astype(f32) * scale).astype(mxu_dtype)
        k = k_ref[:, sl].astype(mxu_dtype)
        # q @ k^T via contracting the last dims (no explicit transpose copy).
        # TODO(synk): check the Mosaic lowering for a per-head vxpose of k.
        s = lax.dot_general(q, k, (((1,), (1,)), ((), ())),
                            preferred_element_type=f32)          # (tq, n) f32
        s = s - jnp.max(s, axis=-1, keepdims=True)               # stable softmax
        p = jnp.exp(s)
        inv = pl.reciprocal(jnp.sum(p, axis=-1, keepdims=True), approx=True)
        o = jnp.dot(p.astype(mxu_dtype), v_ref[:, sl].astype(mxu_dtype),
                    preferred_element_type=f32) * inv            # normalize post-PV
        # Store this head's (tq, Dh) slice immediately: no concat, short live range.
        o_ref[:, sl] = o.astype(o_ref.dtype)


def _attn_small_kernel(qkv_ref, o_ref, *, num_heads, head_dim, scale, mxu_dtype):
    """Fallback for dim < 128 / lane-misaligned head_dim: one batch per step."""
    f32 = jnp.float32
    dim = num_heads * head_dim
    blk = qkv_ref[...]                                           # (n, 3*dim), small
    for h in range(num_heads):
        lo = h * head_dim
        q = (blk[:, lo:lo + head_dim].astype(f32) * scale).astype(mxu_dtype)
        k = blk[:, dim + lo:dim + lo + head_dim].astype(mxu_dtype)
        v = blk[:, 2 * dim + lo:2 * dim + lo + head_dim].astype(mxu_dtype)
        s = lax.dot_general(q, k, (((1,), (1,)), ((), ())),
                            preferred_element_type=f32)
        s = s - jnp.max(s, axis=-1, keepdims=True)
        p = jnp.exp(s)
        inv = pl.reciprocal(jnp.sum(p, axis=-1, keepdims=True), approx=True)
        o = jnp.dot(p.astype(mxu_dtype), v, preferred_element_type=f32) * inv
        o_ref[:, lo:lo + head_dim] = o.astype(o_ref.dtype)


def pallas_attention(qkv, *, num_heads, head_dim, scale):
    """qkv: (B, N, 3*dim) with channel layout (qkv, head, d) -> (B, N, dim)."""
    b, n, three_dim = qkv.shape
    dim = num_heads * head_dim
    assert three_dim == 3 * dim
    mxu_dtype = qkv.dtype                        # bf16 activations feed the MXU

    cost = pl.CostEstimate(
        flops=4 * b * num_heads * n * n * head_dim,
        transcendentals=b * num_heads * n * n,
        bytes_accessed=(b * n * three_dim + b * n * dim) * _isz(qkv.dtype),
    )

    hpb = _heads_per_block(num_heads, head_dim)
    if hpb is None:
        # Small / misaligned dims: full-channel block per batch element.
        kernel = functools.partial(_attn_small_kernel, num_heads=num_heads,
                                   head_dim=head_dim, scale=scale,
                                   mxu_dtype=mxu_dtype)
        return pl.pallas_call(
            kernel,
            out_shape=jax.ShapeDtypeStruct((b, n, dim), qkv.dtype),
            grid=(b,),
            in_specs=[pl.BlockSpec((None, n, three_dim), lambda bi: (bi, 0, 0))],
            out_specs=pl.BlockSpec((None, n, dim), lambda bi: (bi, 0, 0)),
            compiler_params=pltpu.CompilerParams(
                dimension_semantics=("parallel",),
                vmem_limit_bytes=32 * 1024 * 1024,
            ),
            cost_estimate=cost,
        )(qkv)

    # 128-lane head-block path: grid over (batch, head block, q tile), all
    # independent ("parallel") -> pipelined DMAs + megacore sharding on v7x.
    dh_blk = hpb * head_dim
    nhb = dim // dh_blk
    tq = _pick_q_tile(n)
    nq = n // tq

    kernel = functools.partial(_attn_heads_kernel, heads_per_block=hpb,
                               head_dim=head_dim, scale=scale,
                               mxu_dtype=mxu_dtype)

    return pl.pallas_call(
        kernel,
        out_shape=jax.ShapeDtypeStruct((b, n, dim), qkv.dtype),
        grid=(b, nhb, nq),
        in_specs=[
            # q / k / v sections of the (qkv, head, d) channel layout; every
            # block is dh_blk (= 128) lanes wide, so loads/stores are dense.
            pl.BlockSpec((None, tq, dh_blk), lambda bi, hb, qi: (bi, qi, hb)),
            pl.BlockSpec((None, n, dh_blk), lambda bi, hb, qi: (bi, 0, nhb + hb)),
            pl.BlockSpec((None, n, dh_blk), lambda bi, hb, qi: (bi, 0, 2 * nhb + hb)),
        ],
        out_specs=pl.BlockSpec((None, tq, dh_blk), lambda bi, hb, qi: (bi, qi, hb)),
        compiler_params=pltpu.CompilerParams(
            dimension_semantics=("parallel", "parallel", "parallel"),
            vmem_limit_bytes=32 * 1024 * 1024,
        ),
        cost_estimate=cost,
    )(qkv, qkv, qkv)


# ---------------------------------------------------------------------------
# Full forward
# ---------------------------------------------------------------------------
def attention_forward(x, params, num_heads):
    """Pallas implementation of Attention.forward.  x: (B, N, D)."""
    b, n, dim = x.shape
    d = dim // num_heads
    scale = d ** (-0.5)
    act_dtype = params["qkv_w"].dtype     # activations follow the weight dtype (bf16)

    # qkv = Linear(dim, 3*dim, bias=qkv_bias)   (bf16 activation slab out)
    qkv = pallas_linear(x.reshape(b * n, dim), params["qkv_w"],
                        params.get("qkv_b"), out_dtype=act_dtype)
    qkv = qkv.reshape(b, n, 3 * dim)

    # fused per-head scores / softmax / weighted sum (attn_drop = 0 -> identity)
    out = pallas_attention(qkv, num_heads=num_heads, head_dim=d, scale=scale)

    # proj = Linear(dim, dim)   (proj_drop = 0 -> identity); final output in f32
    out = pallas_linear(out.reshape(b * n, dim), params["proj_w"],
                        params["proj_b"], out_dtype=x.dtype)
    return out.reshape(b, n, dim)


# ---------------------------------------------------------------------------
# Deterministic parameter init (PyTorch-Linear-style uniform bounds)
# ---------------------------------------------------------------------------
def init_params(key, dim, qkv_bias=False, param_dtype=jnp.bfloat16):
    k1, k2, k3, k4 = jax.random.split(key, 4)
    bound = 1.0 / math.sqrt(dim)
    params = {
        # stored as (IN, OUT) = transposed PyTorch weight, pre-cast to bf16
        "qkv_w": jax.random.uniform(k1, (dim, 3 * dim), jnp.float32,
                                    -bound, bound).astype(param_dtype),
        "proj_w": jax.random.uniform(k2, (dim, dim), jnp.float32,
                                     -bound, bound).astype(param_dtype),
        "proj_b": jax.random.uniform(k3, (dim,), jnp.float32, -bound, bound),
    }
    if qkv_bias:
        params["qkv_b"] = jax.random.uniform(k4, (3 * dim,), jnp.float32,
                                             -bound, bound)
    return params


# ---------------------------------------------------------------------------
# Pure-JAX reference for verification (f32 math, same parameter values)
# ---------------------------------------------------------------------------
def attention_reference(x, params, num_heads):
    b, n, dim = x.shape
    h = num_heads
    d = dim // h
    scale = d ** (-0.5)
    qkv_w = params["qkv_w"].astype(jnp.float32)
    proj_w = params["proj_w"].astype(jnp.float32)
    qkv = x @ qkv_w
    if "qkv_b" in params:
        qkv = qkv + params["qkv_b"].astype(jnp.float32)
    qkv = qkv.reshape(b, n, 3, h, d).transpose(2, 0, 3, 1, 4)
    q, k, v = qkv[0], qkv[1], qkv[2]                       # (b, h, n, d)
    dots = jnp.einsum("bhid,bhjd->bhij", q, k) * scale
    attn = jax.nn.softmax(dots, axis=-1)
    out = jnp.einsum("bhij,bhjd->bhid", attn, v)
    out = out.transpose(0, 2, 1, 3).reshape(b, n, dim)
    return out @ proj_w + params["proj_b"].astype(jnp.float32)


if __name__ == "__main__":
    key = jax.random.PRNGKey(0)

    # Two small configs: dim=32 exercises the small-dim fallback kernel,
    # dim=128 (head_dim=16, 8 heads per 128-lane block) exercises the
    # lane-aligned head-block grid path.
    configs = [
        dict(B=2, N=8, DIM=32, HEADS=8),
        dict(B=2, N=8, DIM=128, HEADS=8),
    ]

    for cfg in configs:
        kx, kp, key = jax.random.split(key, 3)
        x = jax.random.normal(kx, (cfg["B"], cfg["N"], cfg["DIM"]), jnp.float32)
        params = init_params(kp, cfg["DIM"], qkv_bias=False)

        out = attention_forward(x, params, cfg["HEADS"])
        out = jax.block_until_ready(out)

        ref = attention_reference(x, params, cfg["HEADS"])
        assert out.shape == (cfg["B"], cfg["N"], cfg["DIM"])
        # dtype-aware tolerance: bf16 activations/MXU operands + approx recip
        assert jnp.allclose(out, ref, atol=5e-2, rtol=5e-2), (
            f"mismatch vs reference (dim={cfg['DIM']}), "
            f"max abs err {jnp.max(jnp.abs(out - ref))}")

    print("KERNEL_OK")
</pallas_src>

<mosaic_0001>
module attributes {stable_mosaic.version = 11 : i64} {
  func.func @_linear_kernel(%arg0: i32, %arg1: i32, %arg2: i32, %arg3: memref<16x32xf32, #tpu.memory_space<vmem>>, %arg4: memref<32x96xbf16, #tpu.memory_space<vmem>>, %arg5: memref<16x96xbf16, #tpu.memory_space<vmem>>, %arg6: memref<16x96xf32, #tpu.memory_space<vmem>>) attributes {dimension_semantics = [#tpu.dimension_semantics<parallel>, #tpu.dimension_semantics<parallel>, #tpu.dimension_semantics<arbitrary>], iteration_bounds = array<i64: 1, 1, 1>, scalar_prefetch = 0 : i64, scratch_operands = 1 : i64, tpu.core_type = #tpu.core_type<tc>, window_params = [{transform_indices = @transform_0, window_bounds = array<i64: 16, 32>}, {transform_indices = @transform_1, window_bounds = array<i64: 32, 96>}, {transform_indices = @transform_2, window_bounds = array<i64: 16, 96>}]} {
    %c0_i32 = arith.constant 0 : i32
    %0 = arith.cmpi eq, %arg2, %c0_i32 : i32
    %1 = arith.extui %0 : i1 to i32
    %c0_i32_0 = arith.constant 0 : i32
    %2 = arith.cmpi ne, %1, %c0_i32_0 : i32
    scf.if %2 {
      %cst_10 = arith.constant 0.000000e+00 : f32
      %13 = vector.broadcast %cst_10 : f32 to vector<16x96xf32>
      %c0_11 = arith.constant 0 : index
      %c0_12 = arith.constant 0 : index
      %14 = vector.load %arg6[%c0_11, %c0_12] : memref<16x96xf32, #tpu.memory_space<vmem>>, vector<16x96xf32>
      tpu.vector_store %arg6[%c0_11, %c0_12], %13 {strides = array<i32>} : memref<16x96xf32, #tpu.memory_space<vmem>>, vector<16x96xf32>,
    } else {
    }
    %c0 = arith.constant 0 : index
    %c0_1 = arith.constant 0 : index
    %3 = vector.load %arg6[%c0, %c0_1] : memref<16x96xf32, #tpu.memory_space<vmem>>, vector<16x96xf32>
    %c0_2 = arith.constant 0 : index
    %c0_3 = arith.constant 0 : index
    %4 = vector.load %arg3[%c0_2, %c0_3] : memref<16x32xf32, #tpu.memory_space<vmem>>, vector<16x32xf32>
    %5 = arith.truncf %4 : vector<16x32xf32> to vector<16x32xbf16>
    %c0_4 = arith.constant 0 : index
    %c0_5 = arith.constant 0 : index
    %6 = vector.load %arg4[%c0_4, %c0_5] : memref<32x96xbf16, #tpu.memory_space<vmem>>, vector<32x96xbf16>
    %cst = arith.constant dense<0.000000e+00> : vector<16x96xf32>
    %7 = tpu.matmul %5, %6, %cst {dimension_numbers = #tpu.dot_dimension_numbers<[1], [0], [0], [1], [0, 0, 1, 1], [], []>} : vector<16x32xbf16>, vector<32x96xbf16>, vector<16x96xf32> -> vector<16x96xf32>
    %8 = arith.addf %3, %7 : vector<16x96xf32>
    %c0_6 = arith.constant 0 : index
    %c0_7 = arith.constant 0 : index
    %9 = vector.load %arg6[%c0_6, %c0_7] : memref<16x96xf32, #tpu.memory_space<vmem>>, vector<16x96xf32>
    tpu.vector_store %arg6[%c0_6, %c0_7], %8 {strides = array<i32>} : memref<16x96xf32, #tpu.memory_space<vmem>>, vector<16x96xf32>,
    %c0_i32_8 = arith.constant 0 : i32
    %10 = arith.cmpi eq, %arg2, %c0_i32_8 : i32
    %11 = arith.extui %10 : i1 to i32
    %c0_i32_9 = arith.constant 0 : i32
    %12 = arith.cmpi ne, %11, %c0_i32_9 : i32
    scf.if %12 {
      %c0_10 = arith.constant 0 : index
      %c0_11 = arith.constant 0 : index
      %13 = vector.load %arg6[%c0_10, %c0_11] : memref<16x96xf32, #tpu.memory_space<vmem>>, vector<16x96xf32>
      %14 = arith.truncf %13 : vector<16x96xf32> to vector<16x96xbf16>
      %c0_12 = arith.constant 0 : index
      %c0_13 = arith.constant 0 : index
      %15 = vector.load %arg5[%c0_12, %c0_13] : memref<16x96xbf16, #tpu.memory_space<vmem>>, vector<16x96xbf16>
      tpu.vector_store %arg5[%c0_12, %c0_13], %14 {strides = array<i32>} : memref<16x96xbf16, #tpu.memory_space<vmem>>, vector<16x96xbf16>,
    } else {
    }
    return
  }
  func.func @transform_0(%arg0: i32, %arg1: i32, %arg2: i32) -> (i32, i32) {
    %c0_i32 = arith.constant 0 : i32
    return %arg0, %arg2 : i32, i32
  }
  func.func @transform_1(%arg0: i32, %arg1: i32, %arg2: i32) -> (i32, i32) {
    %c0_i32 = arith.constant 0 : i32
    return %arg2, %arg1 : i32, i32
  }
  func.func @transform_2(%arg0: i32, %arg1: i32, %arg2: i32) -> (i32, i32) {
    %c0_i32 = arith.constant 0 : i32
    return %arg0, %arg1 : i32, i32
  }
}

</mosaic_0001>

<llo_original>
// kernel: tpu_custom_call.1
$region0: #{tpu_custom_call.1}
  #allocation0 [shape = 'u32[]', space=smem, size = 0x4, offset = 0x4, fixed_abs, tag = 'smem constant byte address 0x4 - core index']
  #allocation1 [shape = 'u32[144,128]{1,0:T(1,128)}', space=vmem, size = 0x12000, scoped, tag = 'internal scratch']
  #allocation2 [shape = 'f32[16,96]{1,0:T(8,128)}', space=vmem, size = 0x2000, scoped, tag = 'scratch operand']
  %s0 = inlined_call_operand.hbm [shape: f32[16,32], index: 0, kind: input, shape index: {}]
  %s1 = inlined_call_operand.hbm [shape: bf16[32,96], index: 1, kind: input, shape index: {}]
  %s2 = inlined_call_operand.hbm [shape: bf16[16,96], index: 2, kind: output, shape index: {}]
  %s3 = sld [smem:[#allocation0]]
  $region34: #{tpu_custom_call.1} parent=0
    _
  %s5 = ssub.s32 1, %s3
  %s6 = scalar_select 0, %s5, %s3
  $region1: #{tpu_custom_call.1} parent=0
    #allocation3 [shape = 'u8[8192]{0}', space=vmem, size = 0x2000, scoped, tag = 'input window, operand 0, single buffered']
    #allocation4 [shape = 's32[1]{0}', space=sflag, size = 0x4, scoped, tag = 'scoped memory for tpu_custom_call.1']
    #allocation5 [shape = 's32[1]{0}', space=sflag, size = 0x4, scoped, tag = 'scoped memory for tpu_custom_call.1']
    #allocation6 [shape = 'u8[8192]{0}', space=vmem, size = 0x2000, scoped, tag = 'input window, operand 1, single buffered']
    #allocation7 [shape = 's32[1]{0}', space=sflag, size = 0x4, scoped, tag = 'scoped memory for tpu_custom_call.1']
    #allocation8 [shape = 'u8[4096]{0}', space=vmem, size = 0x1000, scoped, tag = 'output window, operand 0, single buffered']
    %7 = vsyncpa [#allocation4], 0
    %8 = vsyncpa [#allocation7], 0
    %9 = vsyncpa [#allocation5], 0
    // Predicated region
    $region2: #{tpu_custom_call.1} parent=1 // pred_check
      _
    $region3: #{tpu_custom_call.1} parent=1 // pred_check_branch
      %11 = sbr.rel (0) target = $region5
    $region4: #{tpu_custom_call.1} parent=1 // pred_region
      %s13 = ssub.s32 256, 256
      %14 = vsyncadd [#allocation4], %s13
      %s15 = sshll.u32 [#allocation3], 4
      %s16 = int_to_ptr.vmem [resolvable:$true] %s15
      %21 = dma.hbm_to_vmem [thread:$0]  %s0, 256, %s16, [#allocation4], 128, 128, 8
    $region5: #{tpu_custom_call.1} parent=1 // pred_fallthru
      _
    // Predicated region
    $region6: #{tpu_custom_call.1} parent=1 // pred_check
      _
    $region7: #{tpu_custom_call.1} parent=1 // pred_check_branch
      %23 = sbr.rel (0) target = $region9
    $region8: #{tpu_custom_call.1} parent=1 // pred_region
      %s25 = ssub.s32 256, 256
      %26 = vsyncadd [#allocation7], %s25
      %s27 = sshll.u32 [#allocation6], 4
      %s28 = int_to_ptr.vmem [resolvable:$true] %s27
      %33 = dma.hbm_to_vmem [thread:$0]  %s1, 256, %s28, [#allocation7], 64, 64, 4
    $region9: #{tpu_custom_call.1} parent=1 // pred_fallthru
      _
    // Predicated region
    $region10: #{tpu_custom_call.1} parent=1 // pred_check
      _
    $region11: #{tpu_custom_call.1} parent=1 // pred_check_branch
      %35 = sbr.rel (0) target = $region13
    $region12: #{tpu_custom_call.1} parent=1 // pred_region
      %36 = dma.done [#allocation4], 256
    $region13: #{tpu_custom_call.1} parent=1 // pred_fallthru
      _
    // Predicated region
    $region14: #{tpu_custom_call.1} parent=1 // pred_check
      _
    $region15: #{tpu_custom_call.1} parent=1 // pred_check_branch
      %38 = sbr.rel (0) target = $region17
    $region16: #{tpu_custom_call.1} parent=1 // pred_region
      %39 = dma.done [#allocation7], 256
    $region17: #{tpu_custom_call.1} parent=1 // pred_fallthru
      _
    %p41 = scmp.eq.s32.totalorder 0, 0
    // Predicated region
    $region18: #{tpu_custom_call.1} parent=1 // pred_check
      %p42 = pneg %p41
    $region19: #{tpu_custom_call.1} parent=1 // pred_check_branch
      %44 = sbr.rel (%p42) target = $region21
    $region20: #{tpu_custom_call.1} parent=1 // pred_region
      %vm45 = vcmask 785408
      %46 = vst.msk [vmem:[#allocation2] sm:$0xff] %vm45, 0.0
      %47 = vst.msk [vmem:[#allocation2 + $0x8] sm:$0xff] %vm45, 0.0
    $region21: #{tpu_custom_call.1} parent=1 // pred_fallthru
      _
    %v48 = vld [vmem:[#allocation2] sm:$0xff]
    %v49 = vld [vmem:[#allocation2 + $0x8] sm:$0xff]
    %v50 = vld [vmem:[#allocation3] sm:$0xff]
    %v51 = vld [vmem:[#allocation3 + $0x8] sm:$0xff]
    %v52 = vpack.c.bf16 %v51, %v50
    %v53 = vld [vmem:[#allocation6] sm:$0xf]
    %v54 = vld [vmem:[#allocation6 + $0x4] sm:$0xf]
    %v55 = vld [vmem:[#allocation6 + $0x8] sm:$0xf]
    %v56 = vld [vmem:[#allocation6 + $0xc] sm:$0xf]
    %v61 = vunpack.c.l.b16 %v53
    %v62 = vunpack.c.l.b16 %v54
    %v63 = vunpack.c.l.b16 %v55
    %v64 = vunpack.c.l.b16 %v56
    %v65 = vpack.c.b16 %v62, %v61
    %v66 = vpack.c.b16 %v64, %v63
    %vm69 = vcmask 261120
    %v71 = vsel %vm69, %v52, 0
    %73 = vmatprep.subr.bf16.mxu0 0
    %74 = vmatpush1.bf16.msra.mxu0 %v65
    %75 = vmatprep.subr.bf16.mxu0 0
    %76 = vmatpush1.bf16.msra.mxu0 %v66
    %77 = vmatprep.subr.bf16.mxu0 0
    %78 = vmatpush1.bf16.msra.mxu0 0
    %79 = vmatprep.subr.bf16.mxu0 0
    %80 = vmatpush1.bf16.msra.mxu0 0
    %81 = vmatprep.subr.bf16.mxu0 0
    %82 = vmatpush1.bf16.msra.mxu0 0
    %83 = vmatprep.subr.bf16.mxu0 0
    %84 = vmatpush1.bf16.msra.mxu0 0
    %85 = vmatprep.subr.bf16.mxu0 0
    %86 = vmatpush1.bf16.msra.mxu0 0
    %87 = vmatprep.subr.bf16.mxu0 0
    %88 = vmatpush1.bf16.msra.mxu0 0
    %89 = vmatprep.subr.bf16.mxu0 0
    %90 = vmatpush1.bf16.msra.mxu0 0
    %91 = vmatprep.subr.bf16.mxu0 0
    %92 = vmatpush1.bf16.msra.mxu0 0
    %93 = vmatprep.subr.bf16.mxu0 0
    %94 = vmatpush1.bf16.msra.mxu0 0
    %95 = vmatprep.subr.bf16.mxu0 0
    %96 = vmatpush1.bf16.msra.mxu0 0
    %97 = vmatprep.subr.bf16.mxu0 0
    %98 = vmatpush1.bf16.msra.mxu0 0
    %99 = vmatprep.subr.bf16.mxu0 0
    %100 = vmatpush1.bf16.msra.mxu0 0
    %101 = vmatprep.subr.bf16.mxu0 0
    %102 = vmatpush1.bf16.msra.mxu0 0
    %103 = vmatprep.subr.bf16.mxu0 0
    %104 = vmatpush1.bf16.msra.mxu0 0
    %105 = vmatprep.mubr.bf16.mxu0 0
    %106 = vmatmul.mubr.bf16.gmra.mrb[0].mxu0 %v71
    %v107 = vpop.f32.mrb[0].mxu0
    %v108 = vadd.f32 0.0, %v107
    %v109 = vpop.f32.mrb[0].mxu0
    %v110 = vpop.f32.mrb[0].mxu0
    %v111 = vadd.f32 0.0, %v110
    %v112 = vpop.f32.mrb[0].mxu0
    %113 = vdwg.mxu0
    %v114 = vadd.f32 %v48, %v108
    %v115 = vadd.f32 %v49, %v111
    %vm116 = vcmask 785408
    %117 = vst.msk [vmem:[#allocation2] sm:$0xff] %vm116, %v114
    %118 = vst.msk [vmem:[#allocation2 + $0x8] sm:$0xff] %vm116, %v115
    // Predicated region
    $region22: #{tpu_custom_call.1} parent=1 // pred_check
      %p119 = pneg %p41
    $region23: #{tpu_custom_call.1} parent=1 // pred_check_branch
      %121 = sbr.rel (%p119) target = $region25
    $region24: #{tpu_custom_call.1} parent=1 // pred_region
      %v122 = vld [vmem:[#allocation2] sm:$0xff]
      %v123 = vld [vmem:[#allocation2 + $0x8] sm:$0xff]
      %v124 = vpack.c.bf16 %v123, %v122
      %v126 = vunpack.c.l.b16 %v124
      %v127 = vunpack.c.h.b16 %v124
      %v128 = vpack.c.b16 %v126, %v126
      %v129 = vpack.c.b16 %v127, %v127
      %vm132 = vcmask 781312
      %133 = vst.msk [vmem:[#allocation8] sm:$0xf] %vm132, %v128
      %134 = vst.msk [vmem:[#allocation8 + $0x4] sm:$0xf] %vm132, %v129
    $region25: #{tpu_custom_call.1} parent=1 // pred_fallthru
      _
    // Predicated region
    $region26: #{tpu_custom_call.1} parent=1 // pred_check
      _
    $region27: #{tpu_custom_call.1} parent=1 // pred_check_branch
      %136 = sbr.rel (0) target = $region29
    $region28: #{tpu_custom_call.1} parent=1 // pred_region
      %s138 = ssub.s32 128, 128
      %139 = vsyncadd [#allocation5], %s138
      %s140 = sshll.u32 [#allocation8], 4
      %s141 = int_to_ptr.vmem [resolvable:$true] %s140
      %146 = dma.vmem_to_hbm [thread:$0]  %s141, 128, %s2, [#allocation5], 64, 64, 4
    $region29: #{tpu_custom_call.1} parent=1 // pred_fallthru
      _
    // Predicated region
    $region30: #{tpu_custom_call.1} parent=1 // pred_check
      _
    $region31: #{tpu_custom_call.1} parent=1 // pred_check_branch
      %148 = sbr.rel (0) target = $region33
    $region32: #{tpu_custom_call.1} parent=1 // pred_region
      %149 = dma.done [#allocation5], 128
    $region33: #{tpu_custom_call.1} parent=1 // pred_fallthru
      _
    %150 = vsyncpa [#allocation4], 1
    %151 = vsyncpa [#allocation7], 1
    %152 = vsyncpa [#allocation5], 1

</llo_original>
